<compile_context>
chip_gen: v7x
topology: tpu7x:2x2x1
jax: 0.10.0
libtpu: 0.0.40
codegen_flags: <defaults>
</compile_context>

<pallas_src>
import functools

import jax
import jax.numpy as jnp
from jax.experimental import pallas as pl
from jax.experimental.pallas import tpu as pltpu

IN_FEATURES = 10
OUT_FEATURES = 7

MAX_TB = 16384        # batch rows per grid step (fat tiles; op is overhead-bound)
SMALL_B_FASTPATH = 512  # below this, plain XLA matmul wins over kernel launch cost
VMEM_LIMIT_BYTES = 32 * 1024 * 1024


def _round_up(n, m):
    return ((n + m - 1) // m) * m


def _cdiv(a, b):
    return -(-a // b)


def linear_kernel(x_ref, w_ref, b_ref, o_ref):
    # x_ref: (tb, 10) f32   batch tile (PyTorch activation layout)
    # w_ref: (7, 10)  f32   PyTorch weight layout, VMEM-resident across the grid
    # b_ref: (7, 1)   f32   bias, VMEM-resident
    # o_ref: (7, tb)  f32   lane-dense transposed output tile
    acc = jax.lax.dot_general(
        w_ref[...],
        x_ref[...],
        dimension_numbers=(((1,), (1,)), ((), ())),  # contract the 10-wide axes
        preferred_element_type=jnp.float32,
    )  # -> (7, tb), f32 accumulation on the MXU
    o_ref[...] = (acc + b_ref[...]).astype(o_ref.dtype)


def _choose_tile(B):
    """Pick (tb, n_tiles): >=2 tiles when possible (v7x megacore), tb multiple of
    128 (lane-dense output blocks), capped at MAX_TB, roughly balanced."""
    n_target = max(2, _cdiv(B, MAX_TB))
    tb = _round_up(_cdiv(B, n_target), 128)
    if tb >= B:
        # Single full-array tile: block shape == array shape, always layout-legal.
        return B, 1
    return tb, _cdiv(B, tb)


@functools.partial(jax.jit, static_argnames=("force_pallas",))
def linear_forward(x, weight, bias, *, force_pallas=False):
    """x: (B, 10) f32; weight: (7, 10) f32 (PyTorch layout); bias: (7,) f32."""
    B = x.shape[0]

    # Small-batch fast path: kernel launch + pipeline overhead dwarfs the work.
    if not force_pallas and B <= SMALL_B_FASTPATH:
        return x @ weight.T + bias

    tb, n_tiles = _choose_tile(B)
    b2 = bias.reshape(OUT_FEATURES, 1)  # 2-D, broadcasts over the lane (batch) axis

    cost = pl.CostEstimate(
        flops=2 * B * IN_FEATURES * OUT_FEATURES,
        transcendentals=0,
        bytes_accessed=4 * (B * IN_FEATURES + B * OUT_FEATURES
                            + OUT_FEATURES * IN_FEATURES + OUT_FEATURES),
    )

    # No padding of x: grid covers B with cdiv; Pallas drops out-of-bounds writes
    # of the ragged last tile and out-of-bounds input reads only feed those
    # discarded columns.
    out_t = pl.pallas_call(
        linear_kernel,
        out_shape=jax.ShapeDtypeStruct((OUT_FEATURES, B), x.dtype),
        grid_spec=pltpu.PrefetchScalarGridSpec(
            num_scalar_prefetch=0,
            grid=(n_tiles,),
            in_specs=[
                # batch-tiled input: prefetch tile i+1 while computing tile i
                pl.BlockSpec((tb, IN_FEATURES), lambda i: (i, 0)),
                # weight / bias: same block every step -> stay VMEM-resident
                pl.BlockSpec((OUT_FEATURES, IN_FEATURES), lambda i: (0, 0)),
                pl.BlockSpec((OUT_FEATURES, 1), lambda i: (0, 0)),
            ],
            # lane-dense transposed output tile (batch on lanes)
            out_specs=pl.BlockSpec((OUT_FEATURES, tb), lambda i: (0, i)),
        ),
        compiler_params=pltpu.CompilerParams(
            dimension_semantics=("parallel",),  # shard batch tiles across TCs (v7x)
            vmem_limit_bytes=VMEM_LIMIT_BYTES,
        ),
        cost_estimate=cost,
    )(x, weight, b2)

    # Restore PyTorch (B, 7) layout. If the consumer can take (7, B), skip this.
    return out_t.T


if __name__ == "__main__":
    key = jax.random.PRNGKey(0)
    k_x, k_w, k_b, k_x2 = jax.random.split(key, 4)

    # Deterministic parameter init mimicking torch.nn.Linear's U(-1/sqrt(fan_in), ...)
    bound = 1.0 / (IN_FEATURES ** 0.5)
    weight = jax.random.uniform(
        k_w, (OUT_FEATURES, IN_FEATURES), dtype=jnp.float32, minval=-bound, maxval=bound
    )
    bias = jax.random.uniform(
        k_b, (OUT_FEATURES,), dtype=jnp.float32, minval=-bound, maxval=bound
    )

    # Case 1: tiny batch through the Pallas kernel (single full-array tile).
    B1 = 8
    x1 = jax.random.normal(k_x, (B1, IN_FEATURES), dtype=jnp.float32)
    out1 = jax.block_until_ready(linear_forward(x1, weight, bias, force_pallas=True))
    ref1 = x1 @ weight.T + bias
    assert out1.shape == (B1, OUT_FEATURES)
    assert jnp.allclose(out1, ref1, atol=1e-5, rtol=1e-5)

    # Case 2: multi-tile grid with a ragged last tile (exercises cdiv grid + OOB drop).
    B2 = 300
    x2 = jax.random.normal(k_x2, (B2, IN_FEATURES), dtype=jnp.float32)
    out2 = jax.block_until_ready(linear_forward(x2, weight, bias, force_pallas=True))
    ref2 = x2 @ weight.T + bias
    assert out2.shape == (B2, OUT_FEATURES)
    assert jnp.allclose(out2, ref2, atol=1e-5, rtol=1e-5)

    # Case 3: default dispatch at tiny batch uses the XLA fast path.
    out3 = jax.block_until_ready(linear_forward(x1, weight, bias))
    assert jnp.allclose(out3, ref1, atol=1e-5, rtol=1e-5)

    print("KERNEL_OK")
</pallas_src>

<mosaic_0001>
module attributes {stable_mosaic.version = 11 : i64} {
  func.func @linear_kernel(%arg0: i32, %arg1: memref<8x10xf32, #tpu.memory_space<vmem>>, %arg2: memref<7x10xf32, #tpu.memory_space<vmem>>, %arg3: memref<7x1xf32, #tpu.memory_space<vmem>>, %arg4: memref<7x8xf32, #tpu.memory_space<vmem>>) attributes {dimension_semantics = [#tpu.dimension_semantics<parallel>], iteration_bounds = array<i64: 1>, scalar_prefetch = 0 : i64, scratch_operands = 0 : i64, tpu.core_type = #tpu.core_type<tc>, window_params = [{transform_indices = @transform_0, window_bounds = array<i64: 8, 10>}, {pipeline_mode = #tpu.pipeline_mode<synchronous>, transform_indices = @transform_1, window_bounds = array<i64: 7, 10>}, {pipeline_mode = #tpu.pipeline_mode<synchronous>, transform_indices = @transform_2, window_bounds = array<i64: 7, 1>}, {transform_indices = @transform_3, window_bounds = array<i64: 7, 8>}]} {
    %c0 = arith.constant 0 : index
    %c0_0 = arith.constant 0 : index
    %0 = vector.load %arg2[%c0, %c0_0] : memref<7x10xf32, #tpu.memory_space<vmem>>, vector<7x10xf32>
    %c0_1 = arith.constant 0 : index
    %c0_2 = arith.constant 0 : index
    %1 = vector.load %arg1[%c0_1, %c0_2] : memref<8x10xf32, #tpu.memory_space<vmem>>, vector<8x10xf32>
    %cst = arith.constant dense<0.000000e+00> : vector<7x8xf32>
    %2 = tpu.matmul %0, %1, %cst {dimension_numbers = #tpu.dot_dimension_numbers<[1], [1], [0], [0], [0, 0, 1, 0], [], []>} : vector<7x10xf32>, vector<8x10xf32>, vector<7x8xf32> -> vector<7x8xf32>
    %c0_3 = arith.constant 0 : index
    %c0_4 = arith.constant 0 : index
    %3 = vector.load %arg3[%c0_3, %c0_4] : memref<7x1xf32, #tpu.memory_space<vmem>>, vector<7x1xf32>
    %4 = vector.broadcast %3 : vector<7x1xf32> to vector<7x8xf32>
    %5 = arith.addf %2, %4 : vector<7x8xf32>
    %c0_5 = arith.constant 0 : index
    %c0_6 = arith.constant 0 : index
    %6 = vector.load %arg4[%c0_5, %c0_6] : memref<7x8xf32, #tpu.memory_space<vmem>>, vector<7x8xf32>
    tpu.vector_store %arg4[%c0_5, %c0_6], %5 {strides = array<i32>} : memref<7x8xf32, #tpu.memory_space<vmem>>, vector<7x8xf32>,
    return
  }
  func.func @transform_0(%arg0: i32) -> (i32, i32) {
    %c0_i32 = arith.constant 0 : i32
    %c0_i32_0 = arith.constant 0 : i32
    return %arg0, %c0_i32 : i32, i32
  }
  func.func @transform_1(%arg0: i32) -> (i32, i32) {
    %c0_i32 = arith.constant 0 : i32
    %c0_i32_0 = arith.constant 0 : i32
    %c0_i32_1 = arith.constant 0 : i32
    return %c0_i32, %c0_i32_0 : i32, i32
  }
  func.func @transform_2(%arg0: i32) -> (i32, i32) {
    %c0_i32 = arith.constant 0 : i32
    %c0_i32_0 = arith.constant 0 : i32
    %c0_i32_1 = arith.constant 0 : i32
    return %c0_i32, %c0_i32_0 : i32, i32
  }
  func.func @transform_3(%arg0: i32) -> (i32, i32) {
    %c0_i32 = arith.constant 0 : i32
    %c0_i32_0 = arith.constant 0 : i32
    return %c0_i32, %arg0 : i32, i32
  }
}

</mosaic_0001>

<llo_original>
// kernel: linear_forward.1
$region0: #{linear_forward.1}
  #allocation0 [shape = 'u32[]', space=smem, size = 0x4, offset = 0x4, fixed_abs, tag = 'smem constant byte address 0x4 - core index']
  #allocation1 [shape = 'u32[144,128]{1,0:T(1,128)}', space=vmem, size = 0x12000, scoped, tag = 'internal scratch']
  %s0 = inlined_call_operand.vmem [shape: f32[8,10], index: 0, kind: input, shape index: {}]
  %s1 = inlined_call_operand.vmem [shape: f32[7,10], index: 1, kind: input, shape index: {}]
  %s2 = inlined_call_operand.vmem [shape: f32[7,1], index: 2, kind: input, shape index: {}]
  %s3 = inlined_call_operand.vmem [shape: f32[7,8], index: 3, kind: output, shape index: {}]
  %s4 = sld [smem:[#allocation0]]
  $region22: #{linear_forward.1} parent=0
    _
  %s6 = ssub.s32 1, %s4
  %s7 = scalar_select 0, %s6, %s4
  // Predicated region
  $region2: #{linear_forward.1} parent=0 // pred_check
    _
  $region3: #{linear_forward.1} parent=0 // pred_check_branch
    %9 = sbr.rel (0) target = $region5
  $region4: #{linear_forward.1} parent=0 // pred_region
    _
  $region5: #{linear_forward.1} parent=0 // pred_fallthru
    _
  // Predicated region
  $region6: #{linear_forward.1} parent=0 // pred_check
    _
  $region7: #{linear_forward.1} parent=0 // pred_check_branch
    %11 = sbr.rel (0) target = $region9
  $region8: #{linear_forward.1} parent=0 // pred_region
    _
  $region9: #{linear_forward.1} parent=0 // pred_fallthru
    _
  // Predicated region
  $region10: #{linear_forward.1} parent=0 // pred_check
    _
  $region11: #{linear_forward.1} parent=0 // pred_check_branch
    %13 = sbr.rel (0) target = $region13
  $region12: #{linear_forward.1} parent=0 // pred_region
    _
  $region13: #{linear_forward.1} parent=0 // pred_fallthru
    _
  %v14 = vld [vmem:[%s1] sm:$0x7f]
  %v15 = vld [vmem:[%s0] sm:$0xff]
  %v16 = vld [vmem:[%s2] sm:$0x7f]
  %18 = vset.pattern.permute.xlu0 0
  %19 = vperm.xlu0 %18, %v16
  %v20 = vpop.permute.xlu0 %19
  %vm22 = vcmask 80896
  %v24 = vsel %vm22, %v14, 0
  %v27 = vsel %vm22, %v15, 0
  %29 = vmatprep.subr.mxu0 0.0
  %30 = vmatpush1.xpose.msra.mxu0 %v27
  %31 = vmatprep.subr.mxu0 0.0
  %32 = vmatpush1.xpose.msra.mxu0 0.0
  %33 = vmatprep.subr.mxu0 0.0
  %34 = vmatpush1.xpose.msra.mxu0 0.0
  %35 = vmatprep.subr.mxu0 0.0
  %36 = vmatpush1.xpose.msra.mxu0 0.0
  %37 = vmatprep.subr.mxu0 0.0
  %38 = vmatpush1.xpose.msra.mxu0 0.0
  %39 = vmatprep.subr.mxu0 0.0
  %40 = vmatpush1.xpose.msra.mxu0 0.0
  %41 = vmatprep.subr.mxu0 0.0
  %42 = vmatpush1.xpose.msra.mxu0 0.0
  %43 = vmatprep.subr.mxu0 0.0
  %44 = vmatpush1.xpose.msra.mxu0 0.0
  %45 = vmatprep.subr.mxu0 0.0
  %46 = vmatpush1.xpose.msra.mxu0 0.0
  %47 = vmatprep.subr.mxu0 0.0
  %48 = vmatpush1.xpose.msra.mxu0 0.0
  %49 = vmatprep.subr.mxu0 0.0
  %50 = vmatpush1.xpose.msra.mxu0 0.0
  %51 = vmatprep.subr.mxu0 0.0
  %52 = vmatpush1.xpose.msra.mxu0 0.0
  %53 = vmatprep.subr.mxu0 0.0
  %54 = vmatpush1.xpose.msra.mxu0 0.0
  %55 = vmatprep.subr.mxu0 0.0
  %56 = vmatpush1.xpose.msra.mxu0 0.0
  %57 = vmatprep.subr.mxu0 0.0
  %58 = vmatpush1.xpose.msra.mxu0 0.0
  %59 = vmatprep.subr.mxu0 0.0
  %60 = vmatpush1.xpose.msra.mxu0 0.0
  %61 = vmatprep.subr.mxu0 0.0
  %62 = vmatpush1.xpose.msra.mxu0 0.0
  %63 = vmatprep.subr.mxu0 0.0
  %64 = vmatpush1.xpose.msra.mxu0 0.0
  %65 = vmatprep.subr.mxu0 0.0
  %66 = vmatpush1.xpose.msra.mxu0 0.0
  %67 = vmatprep.subr.mxu0 0.0
  %68 = vmatpush1.xpose.msra.mxu0 0.0
  %69 = vmatprep.subr.mxu0 0.0
  %70 = vmatpush1.xpose.msra.mxu0 0.0
  %71 = vmatprep.subr.mxu0 0.0
  %72 = vmatpush1.xpose.msra.mxu0 0.0
  %73 = vmatprep.subr.mxu0 0.0
  %74 = vmatpush1.xpose.msra.mxu0 0.0
  %75 = vmatprep.subr.mxu0 0.0
  %76 = vmatpush1.xpose.msra.mxu0 0.0
  %77 = vmatprep.subr.mxu0 0.0
  %78 = vmatpush1.xpose.msra.mxu0 0.0
  %79 = vmatprep.subr.mxu0 0.0
  %80 = vmatpush1.xpose.msra.mxu0 0.0
  %81 = vmatprep.subr.mxu0 0.0
  %82 = vmatpush1.xpose.msra.mxu0 0.0
  %83 = vmatprep.subr.mxu0 0.0
  %84 = vmatpush1.xpose.msra.mxu0 0.0
  %85 = vmatprep.subr.mxu0 0.0
  %86 = vmatpush1.xpose.msra.mxu0 0.0
  %87 = vmatprep.subr.mxu0 0.0
  %88 = vmatpush1.xpose.msra.mxu0 0.0
  %89 = vmatprep.subr.mxu0 0.0
  %90 = vmatpush1.xpose.msra.mxu0 0.0
  %91 = vmatprep.subr.mxu0 0.0
  %92 = vmatpush1.xpose.msra.mxu0 0.0
  %93 = vmatprep.mubr.f32.mxu0 0.0
  %94 = vmatmul.mubr.f32.gmra.mrb[0].mxu0 %v24
  %v95 = vpop.f32.mrb[0].mxu0
  %v96 = vadd.f32 %v20, %v95
  %v97 = vpop.f32.mrb[0].mxu0
  %98 = vdwg.mxu0
  %vm99 = vcmask 63488
  %100 = vst.msk [vmem:[%s3] sm:$0x7f] %vm99, %v96
  // Predicated region
  $region14: #{linear_forward.1} parent=0 // pred_check
    _
  $region15: #{linear_forward.1} parent=0 // pred_check_branch
    %102 = sbr.rel (0) target = $region17
  $region16: #{linear_forward.1} parent=0 // pred_region
    _
  $region17: #{linear_forward.1} parent=0 // pred_fallthru
    _
  // Predicated region
  $region18: #{linear_forward.1} parent=0 // pred_check
    _
  $region19: #{linear_forward.1} parent=0 // pred_check_branch
    %104 = sbr.rel (0) target = $region21
  $region20: #{linear_forward.1} parent=0 // pred_region
    _
  $region21: #{linear_forward.1} parent=0 // pred_fallthru
    _

</llo_original>
